<compile_context>
chip_gen: v6e
topology: v6e:2x2x1
jax: 0.10.0
libtpu: 0.0.40
codegen_flags: <defaults>
</compile_context>

<pallas_src>
import math

import jax
import jax.numpy as jnp
from jax.experimental import pallas as pl
from jax.experimental.pallas import tpu as pltpu


def _make_dma_copy_kernel(chunks):
    """Build a kernel that DMA-copies static (start, size) row-chunks from the
    input HBM ref to the output HBM ref. All chunk DMAs are started before any
    wait so they overlap across DMA engines."""

    def kernel(x_hbm, o_hbm, sems):
        copies = []
        for idx, (start, size) in enumerate(chunks):
            cp = pltpu.make_async_copy(
                x_hbm.at[pl.ds(start, size), :],
                o_hbm.at[pl.ds(start, size), :],
                sems.at[idx],
            )
            cp.start()
            copies.append(cp)
        for cp in copies:
            cp.wait()

    return kernel


def flatten(x):
    """Pallas equivalent of torch Flatten: (B, ...) -> (B, prod(...))."""
    B = x.shape[0]
    flat = math.prod(x.shape[1:]) if x.ndim > 1 else 1
    itemsize = jnp.dtype(x.dtype).itemsize

    if B == 0 or flat == 0:
        # Nothing to copy; metadata-only reshape is exact.
        return x.reshape(B, flat)

    # Metadata-only reshape in HBM (== torch .contiguous().view on NCHW).
    x2 = x.reshape(B, flat)

    # Chunking: one whole-array DMA for small/medium inputs; for large inputs
    # split into a few big static chunks along the batch dim so multiple DMA
    # engines can be used. Chunk boundaries are static Python ints.
    total_bytes = B * flat * itemsize
    n_chunks = min(4, B) if total_bytes >= (8 << 20) else 1

    chunks = []
    start = 0
    base, rem = divmod(B, n_chunks)
    for c in range(n_chunks):
        size = base + (1 if c < rem else 0)
        if size > 0:
            chunks.append((start, size))
        start += size

    return pl.pallas_call(
        _make_dma_copy_kernel(tuple(chunks)),
        out_shape=jax.ShapeDtypeStruct((B, flat), x.dtype),
        in_specs=[pl.BlockSpec(memory_space=pl.ANY)],
        out_specs=pl.BlockSpec(memory_space=pl.ANY),
        scratch_shapes=[pltpu.SemaphoreType.DMA((len(chunks),))],
        cost_estimate=pl.CostEstimate(
            flops=0,
            transcendentals=0,
            bytes_accessed=2 * B * flat * itemsize,
        ),
    )(x2)


if __name__ == "__main__":
    key = jax.random.PRNGKey(0)
    # Small NCHW input consistent with the module's forward.
    x = jax.random.normal(key, (2, 4, 16, 16), dtype=jnp.float32)

    out = flatten(x)
    out = jax.block_until_ready(out)

    # Reference: plain reshape (== torch .contiguous().view(B, -1) on NCHW).
    ref = x.reshape(x.shape[0], -1)
    assert out.shape == ref.shape, (out.shape, ref.shape)
    assert out.dtype == ref.dtype, (out.dtype, ref.dtype)
    assert jnp.array_equal(out, ref), "Pallas flatten mismatch vs reference"

    print("KERNEL_OK")
</pallas_src>

<mosaic_0001>
module attributes {stable_mosaic.version = 11 : i64} {
  func.func @kernel(%arg0: memref<2x1024xf32, #tpu.memory_space<any>>, %arg1: memref<2x1024xf32, #tpu.memory_space<any>>, %arg2: memref<1x!tpu.dma_semaphore, #tpu.memory_space<semaphore_mem>>) attributes {dimension_semantics = [], scalar_prefetch = 0 : i64, scratch_operands = 1 : i64, tpu.core_type = #tpu.core_type<tc>} {
    %c0_i32 = arith.constant 0 : i32
    %c0_i32_0 = arith.constant 0 : i32
    %c0_i32_1 = arith.constant 0 : i32
    %0 = tpu.memref_slice %arg0[%c0_i32_0, %c0_i32_1] : memref<2x1024xf32, #tpu.memory_space<any>> -> memref<2x1024xf32, #tpu.memory_space<any>>
    %c0_i32_2 = arith.constant 0 : i32
    %c0_i32_3 = arith.constant 0 : i32
    %1 = tpu.memref_slice %arg1[%c0_i32_2, %c0_i32_3] : memref<2x1024xf32, #tpu.memory_space<any>> -> memref<2x1024xf32, #tpu.memory_space<any>>
    %2 = tpu.memref_slice %arg2[%c0_i32] : memref<1x!tpu.dma_semaphore, #tpu.memory_space<semaphore_mem>> -> memref<1x!tpu.dma_semaphore, #tpu.memory_space<semaphore_mem>>
    %3 = tpu.memref_squeeze %2 : memref<1x!tpu.dma_semaphore, #tpu.memory_space<semaphore_mem>> -> memref<!tpu.dma_semaphore, #tpu.memory_space<semaphore_mem>>
    tpu.enqueue_dma source(%0 : memref<2x1024xf32, #tpu.memory_space<any>>) target(%1 : memref<2x1024xf32, #tpu.memory_space<any>>) target_semaphore(%3 : memref<!tpu.dma_semaphore, #tpu.memory_space<semaphore_mem>>)
    %c0_i32_4 = arith.constant 0 : i32
    %c0_i32_5 = arith.constant 0 : i32
    %c0_i32_6 = arith.constant 0 : i32
    %4 = tpu.memref_slice %arg0[%c0_i32_5, %c0_i32_6] : memref<2x1024xf32, #tpu.memory_space<any>> -> memref<2x1024xf32, #tpu.memory_space<any>>
    %c0_i32_7 = arith.constant 0 : i32
    %c0_i32_8 = arith.constant 0 : i32
    %5 = tpu.memref_slice %arg1[%c0_i32_7, %c0_i32_8] : memref<2x1024xf32, #tpu.memory_space<any>> -> memref<2x1024xf32, #tpu.memory_space<any>>
    %6 = tpu.memref_slice %arg2[%c0_i32_4] : memref<1x!tpu.dma_semaphore, #tpu.memory_space<semaphore_mem>> -> memref<1x!tpu.dma_semaphore, #tpu.memory_space<semaphore_mem>>
    %7 = tpu.memref_squeeze %6 : memref<1x!tpu.dma_semaphore, #tpu.memory_space<semaphore_mem>> -> memref<!tpu.dma_semaphore, #tpu.memory_space<semaphore_mem>>
    tpu.wait_dma2 semaphore(%7 : memref<!tpu.dma_semaphore, #tpu.memory_space<semaphore_mem>>) src(%4 : memref<2x1024xf32, #tpu.memory_space<any>>) dst(%5 : memref<2x1024xf32, #tpu.memory_space<any>>)
    return
  }
}

</mosaic_0001>

<llo_original>
// kernel: tpu_custom_call.1
$region0: #{tpu_custom_call.1}
  #allocation0 [shape = 'u32[]', space=smem, size = 0x4, offset = 0x4, fixed_abs, tag = 'smem constant byte address 0x4 - core index']
  #allocation1 [shape = 'u32[144,128]{1,0:T(1,128)}', space=vmem, size = 0x12000, scoped, tag = 'internal scratch']
  #allocation2 [shape = 's32[1]{0}', space=sflag, size = 0x4, scoped, tag = 'scratch operand']
  #allocation3 [shape = 's32[]', space=sflag, size = 0x4, offset = 0, fixed_abs, tag = 'sflag constant byte address 0x0 - dummy sync flag']
  #allocation4 [shape = 'u32[0]{0}', space=smem, size = 0, offset = 0, fixed_abs, tag = 'smem constant byte address 0x0 - null']
  %s0 = inlined_call_operand.hbm [shape: f32[2,1024], index: 0, kind: input, shape index: {}]
  %s1 = inlined_call_operand.hbm [shape: f32[2,1024], index: 1, kind: output, shape index: {}]
  %s2 = sld [smem:[#allocation0]]
  $region2: #{tpu_custom_call.1} parent=0
    _
  %s4 = ssub.s32 1, %s2
  %s5 = scalar_select 0, %s4, %s2
  %s7 = sshll.u32 1, 14
  %s8 = sxor.u32 4294967295, %s7
  %12 = dma.general %s0, 256, %s1, [#allocation2], 131072, [#allocation4], 0, 0
  %s13 = smul.u32 2, 1
  %s14 = smul.u32 %s13, 8
  %s15 = sshll.u32 %s14, 4
  %16 = dma.done [#allocation2], %s15
  %17 = vsyncmov [#allocation2]
  %s18 = vpop.sfrf %17
  %p19 = scmp.eq.s32.totalorder %s18, 0
  %p20 = pneg %p19
  %22 = shalt.err (%p20)

</llo_original>
